<compile_context>
chip_gen: v5e
topology: v5e:2x2
jax: 0.10.0
libtpu: 0.0.40
codegen_flags: <defaults>
</compile_context>

<pallas_src>
import functools

import jax
import jax.numpy as jnp
from jax.experimental import pallas as pl
from jax.experimental.pallas import tpu as pltpu


def _round_up(x, m):
    return (x + m - 1) // m * m


# --------------------------------------------------------------------------------------
# Kernel
# --------------------------------------------------------------------------------------
def mixer_kernel(x_ref, w1_ref, b1_ref, w2_ref, b2_ref, o_ref):
    # fc1 (BatchNorm already folded into w1/b1 in the glue) -> ReLU.  bf16 MXU, f32 accumulate.
    h = jnp.dot(x_ref[...], w1_ref[...], preferred_element_type=jnp.float32) + b1_ref[...]
    h = jnp.maximum(h, 0.0)
    # TODO(synk): dropout is identity in eval mode; not implemented.
    z = jnp.dot(h.astype(jnp.bfloat16), w2_ref[...],
                preferred_element_type=jnp.float32) + b2_ref[...]
    # Residual (projection == Identity).  x_ref is re-read here (instead of binding one value
    # across both matmuls) to keep the bf16 x tile's live range short.
    o_ref[...] = (x_ref[...].astype(jnp.float32) + z).astype(jnp.bfloat16)


# --------------------------------------------------------------------------------------
# Tiling / VMEM budget helpers
# --------------------------------------------------------------------------------------
def _vmem_need_bytes(tm, Kp, Dp, single_buffer_weights):
    """Rough per-kernel VMEM usage for a given row tile."""
    wbufs = 1 if single_buffer_weights else 2
    x_io = 2 * tm * Kp * 2                      # bf16 x tile, double-buffered
    o_io = 2 * tm * Kp * 2                      # bf16 out tile, double-buffered
    weights = wbufs * (2 * Kp * Dp * 2 + (Dp + Kp) * 4)   # w1,w2 bf16 + f32 biases
    body = tm * (Dp + 2 * Kp) * 4               # f32 h, z, residual upcast inside the body
    return x_io + o_io + weights + body


def _pick_row_tile(M, Kp, Dp, tm_max, budget_bytes, single_buffer_weights):
    """Largest multiple-of-16 row tile within the VMEM budget, rebalanced to >= 2 grid steps."""
    tm = max(16, _round_up(min(tm_max, max(M, 1)), 16))
    while tm > 16 and _vmem_need_bytes(tm, Kp, Dp, single_buffer_weights) > budget_bytes:
        tm = _round_up(tm // 2, 16)
    # >= 2 roughly-equal steps so both v7x TensorCores get work (and padding waste stays small).
    steps = max(2, pl.cdiv(M, tm))
    tm = max(16, _round_up(pl.cdiv(M, steps), 16))
    return tm


def _replicated_spec(shape, single_buffer):
    """BlockSpec for an operand that is identical for every grid step."""
    index_map = lambda i: (0,) * len(shape)
    if single_buffer:
        # Constant block index -> one VMEM buffer is enough; halves weight VMEM footprint.
        return pl.BlockSpec(shape, index_map, pipeline_mode=pl.Buffered(1))
    return pl.BlockSpec(shape, index_map)


# --------------------------------------------------------------------------------------
# Token-level entry point: callers holding the '(b n) (t c)' layout use this directly and
# skip the transpose copies around the kernel entirely.
# --------------------------------------------------------------------------------------
def mixer_tokens(x_flat, w1, b1, w2, b2, *, tm_max=1024, vmem_budget_bytes=32 * 1024 * 1024,
                 single_buffer_weights=True):
    """x_flat: (M, K) float; w1: (K, D) with BN folded in; b1: (D,); w2: (D, K); b2: (K,).

    Returns (M, K) bfloat16:  x + fc2(relu(fc1(bn(x)))).
    """
    M, K = x_flat.shape
    D = w1.shape[1]
    Kp = _round_up(K, 128)
    Dp = _round_up(D, 128)          # keep 128-rounded (not 256): HBM-bound, extra pad = waste
    tm = _pick_row_tile(M, Kp, Dp, tm_max, vmem_budget_bytes, single_buffer_weights)
    Mp = _round_up(M, tm)

    # bf16 cast + pad: under jit these fuse into the caller's layout transpose.  Padding is
    # skipped entirely when already lane/tile aligned.
    xb = x_flat.astype(jnp.bfloat16)
    if (Mp, Kp) != (M, K):
        xb = jnp.pad(xb, ((0, Mp - M), (0, Kp - K)))

    w1p = w1.astype(jnp.bfloat16)
    b1p = b1.astype(jnp.float32).reshape(1, D)
    w2p = w2.astype(jnp.bfloat16)
    b2p = b2.astype(jnp.float32).reshape(1, K)
    if Kp != K or Dp != D:
        # zero padding: padded K rows / D cols contribute exactly 0 to the matmuls
        w1p = jnp.pad(w1p, ((0, Kp - K), (0, Dp - D)))
        b1p = jnp.pad(b1p, ((0, 0), (0, Dp - D)))
        w2p = jnp.pad(w2p, ((0, Dp - D), (0, Kp - K)))
        b2p = jnp.pad(b2p, ((0, 0), (0, Kp - K)))

    cost = pl.CostEstimate(
        flops=4 * Mp * Kp * Dp,                                   # two Mp x Kp x Dp matmuls
        transcendentals=0,
        bytes_accessed=2 * Mp * Kp * 2 + 2 * Kp * Dp * 2 + (Dp + Kp) * 4,  # bf16 x/out/weights
    )
    need = _vmem_need_bytes(tm, Kp, Dp, single_buffer_weights)
    # Derived scoped-VMEM limit: actual need + 25% + 4 MiB headroom, floored at 16 MiB and
    # capped at 44 MiB so v7x (64 MiB physical) keeps room for Mosaic internal scratch.
    vmem_limit = int(min(max(need + need // 4 + (4 << 20), 16 << 20), 44 << 20))

    out_pad = pl.pallas_call(
        mixer_kernel,
        out_shape=jax.ShapeDtypeStruct((Mp, Kp), jnp.bfloat16),
        grid_spec=pl.GridSpec(
            grid=(Mp // tm,),
            in_specs=[
                pl.BlockSpec((tm, Kp), lambda i: (i, 0)),               # x tile (also residual)
                _replicated_spec((Kp, Dp), single_buffer_weights),      # fc1 weight (BN folded)
                _replicated_spec((1, Dp), single_buffer_weights),       # fc1 bias  (BN folded)
                _replicated_spec((Dp, Kp), single_buffer_weights),      # fc2 weight
                _replicated_spec((1, Kp), single_buffer_weights),       # fc2 bias
            ],
            out_specs=pl.BlockSpec((tm, Kp), lambda i: (i, 0)),
        ),
        compiler_params=pltpu.CompilerParams(
            dimension_semantics=("parallel",),
            vmem_limit_bytes=vmem_limit,
        ),
        cost_estimate=cost,
    )(xb, w1p, b1p, w2p, b2p)

    if (Mp, Kp) != (M, K):
        out_pad = out_pad[:M, :K]
    return out_pad


# --------------------------------------------------------------------------------------
# (B, C, N, T) wrapper reproducing the PyTorch module layout
# --------------------------------------------------------------------------------------
def feature_mix_mixer_block(x, params, *, tm_max=1024, single_buffer_weights=True):
    B, C, N, T = x.shape
    K = T * C
    M = B * N

    # Fold BatchNorm2d (eval-mode running stats, normalizing the T axis of the permuted input)
    # into fc1: y = scale[t]*x + shift[t]  =>  w1' = scale_vec[:,None]*w1, b1' = b1 + shift_vec@w1.
    scale = params["gamma"] * jax.lax.rsqrt(params["rv"] + params["eps"])      # (T,)
    shift = params["beta"] - params["rm"] * scale                              # (T,)
    scale_vec = jnp.repeat(scale, C)                                           # k = t*C + c
    shift_vec = jnp.repeat(shift, C)
    w1f = scale_vec[:, None] * params["w1"]                                    # (K, D)
    b1f = params["b1"] + shift_vec @ params["w1"]                              # (D,)

    # 'b c n t -> (b n) (t c)'; the bf16 cast + pad inside mixer_tokens fuse into this copy
    # under jit.
    x_flat = jnp.transpose(x, (0, 2, 3, 1)).reshape(M, K)
    y = mixer_tokens(x_flat, w1f, b1f, params["w2"], params["b2"],
                     tm_max=tm_max, single_buffer_weights=single_buffer_weights)
    # '(b n) (t c) -> b c n t'; f32 upcast fuses into this copy.  projection == Identity, so
    # the residual was already added in the kernel.
    return y.reshape(B, N, T, C).transpose(0, 3, 1, 2).astype(x.dtype)


# --------------------------------------------------------------------------------------
# Pure-JAX f32 reference of the PyTorch forward (eval mode)
# --------------------------------------------------------------------------------------
def reference(x, params):
    B, C, N, T = x.shape
    eps = params["eps"]
    xp = jnp.transpose(x, (0, 3, 2, 1))                                   # (B, T, N, C)
    inv = jax.lax.rsqrt(params["rv"] + eps)
    y = (xp - params["rm"][None, :, None, None]) * inv[None, :, None, None]
    y = y * params["gamma"][None, :, None, None] + params["beta"][None, :, None, None]
    y = jnp.transpose(y, (0, 2, 1, 3)).reshape(B, N, T * C)               # b n (t c)
    h = jnp.maximum(y @ params["w1"] + params["b1"], 0.0)
    z = h @ params["w2"] + params["b2"]
    z = z.reshape(B, N, T, C).transpose(0, 3, 1, 2)                       # b c n t
    return x + z                                                          # projection == Identity


if __name__ == "__main__":
    # Module constraints: input_channel == output_channel == T (BatchNorm2d over the permuted
    # T axis + Identity projection), hidden == C, fc1 in_features = T*C.
    B, C, N, T = 2, 4, 16, 8
    d_model = 32
    K = T * C

    key = jax.random.PRNGKey(0)
    ks = jax.random.split(key, 9)
    x = jax.random.normal(ks[0], (B, C, N, T), jnp.float32)
    params = dict(
        gamma=1.0 + 0.1 * jax.random.normal(ks[1], (T,), jnp.float32),
        beta=0.1 * jax.random.normal(ks[2], (T,), jnp.float32),
        rm=0.05 * jax.random.normal(ks[3], (T,), jnp.float32),
        rv=jnp.abs(1.0 + 0.1 * jax.random.normal(ks[4], (T,), jnp.float32)),
        eps=1e-5,
        w1=0.1 * jax.random.normal(ks[5], (K, d_model), jnp.float32),   # fc1.weight.T
        b1=0.1 * jax.random.normal(ks[6], (d_model,), jnp.float32),
        w2=0.1 * jax.random.normal(ks[7], (d_model, K), jnp.float32),   # fc2.weight.T
        b2=0.1 * jax.random.normal(ks[8], (K,), jnp.float32),
    )

    # jit so the layout transpose, bf16 cast and pad fuse into a single XLA copy on each side.
    run = jax.jit(feature_mix_mixer_block)
    try:
        out = jax.block_until_ready(run(x, params))
    except Exception:
        # Fallback for runtimes that reject pipeline_mode=pl.Buffered(1) on the resident
        # weight/bias BlockSpecs: retry with default double buffering.
        run = jax.jit(functools.partial(feature_mix_mixer_block, single_buffer_weights=False))
        out = jax.block_until_ready(run(x, params))

    ref = reference(x, params)
    assert out.shape == (B, C, N, T), out.shape
    assert out.dtype == jnp.float32, out.dtype
    max_err = float(jnp.max(jnp.abs(out - ref)))
    # bf16 x/out + bf16 MXU matmuls (f32 accumulation) vs. the all-f32 reference.
    assert jnp.allclose(out, ref, atol=1e-1, rtol=5e-2), max_err
    print("KERNEL_OK")
</pallas_src>

<mosaic_0001>
module attributes {stable_mosaic.version = 11 : i64} {
  func.func @mixer_kernel(%arg0: i32, %arg1: memref<16x128xbf16, #tpu.memory_space<vmem>>, %arg2: memref<128x128xbf16, #tpu.memory_space<vmem>>, %arg3: memref<1x128xf32, #tpu.memory_space<vmem>>, %arg4: memref<128x128xbf16, #tpu.memory_space<vmem>>, %arg5: memref<1x128xf32, #tpu.memory_space<vmem>>, %arg6: memref<16x128xbf16, #tpu.memory_space<vmem>>) attributes {dimension_semantics = [#tpu.dimension_semantics<parallel>], iteration_bounds = array<i64: 2>, scalar_prefetch = 0 : i64, scratch_operands = 0 : i64, tpu.core_type = #tpu.core_type<tc>, window_params = [{transform_indices = @transform_0, window_bounds = array<i64: 16, 128>}, {pipeline_mode = #tpu.pipeline_mode<synchronous>, transform_indices = @transform_1, window_bounds = array<i64: 128, 128>}, {pipeline_mode = #tpu.pipeline_mode<synchronous>, transform_indices = @transform_2, window_bounds = array<i64: 1, 128>}, {pipeline_mode = #tpu.pipeline_mode<synchronous>, transform_indices = @transform_3, window_bounds = array<i64: 128, 128>}, {pipeline_mode = #tpu.pipeline_mode<synchronous>, transform_indices = @transform_4, window_bounds = array<i64: 1, 128>}, {transform_indices = @transform_5, window_bounds = array<i64: 16, 128>}]} {
    %c0 = arith.constant 0 : index
    %c0_0 = arith.constant 0 : index
    %0 = vector.load %arg1[%c0, %c0_0] : memref<16x128xbf16, #tpu.memory_space<vmem>>, vector<16x128xbf16>
    %c0_1 = arith.constant 0 : index
    %c0_2 = arith.constant 0 : index
    %1 = vector.load %arg2[%c0_1, %c0_2] : memref<128x128xbf16, #tpu.memory_space<vmem>>, vector<128x128xbf16>
    %cst = arith.constant dense<0.000000e+00> : vector<16x128xf32>
    %2 = tpu.matmul %0, %1, %cst {dimension_numbers = #tpu.dot_dimension_numbers<[1], [0], [0], [1], [0, 0, 1, 1], [], []>} : vector<16x128xbf16>, vector<128x128xbf16>, vector<16x128xf32> -> vector<16x128xf32>
    %c0_3 = arith.constant 0 : index
    %c0_4 = arith.constant 0 : index
    %3 = vector.load %arg3[%c0_3, %c0_4] : memref<1x128xf32, #tpu.memory_space<vmem>>, vector<1x128xf32>
    %4 = vector.broadcast %3 : vector<1x128xf32> to vector<16x128xf32>
    %5 = arith.addf %2, %4 : vector<16x128xf32>
    %cst_5 = arith.constant 0.000000e+00 : f32
    %6 = vector.broadcast %cst_5 : f32 to vector<16x128xf32>
    %7 = arith.maximumf %5, %6 : vector<16x128xf32>
    %8 = arith.truncf %7 : vector<16x128xf32> to vector<16x128xbf16>
    %c0_6 = arith.constant 0 : index
    %c0_7 = arith.constant 0 : index
    %9 = vector.load %arg4[%c0_6, %c0_7] : memref<128x128xbf16, #tpu.memory_space<vmem>>, vector<128x128xbf16>
    %cst_8 = arith.constant dense<0.000000e+00> : vector<16x128xf32>
    %10 = tpu.matmul %8, %9, %cst_8 {dimension_numbers = #tpu.dot_dimension_numbers<[1], [0], [0], [1], [0, 0, 1, 1], [], []>} : vector<16x128xbf16>, vector<128x128xbf16>, vector<16x128xf32> -> vector<16x128xf32>
    %c0_9 = arith.constant 0 : index
    %c0_10 = arith.constant 0 : index
    %11 = vector.load %arg5[%c0_9, %c0_10] : memref<1x128xf32, #tpu.memory_space<vmem>>, vector<1x128xf32>
    %12 = vector.broadcast %11 : vector<1x128xf32> to vector<16x128xf32>
    %13 = arith.addf %10, %12 : vector<16x128xf32>
    %c0_11 = arith.constant 0 : index
    %c0_12 = arith.constant 0 : index
    %14 = vector.load %arg1[%c0_11, %c0_12] : memref<16x128xbf16, #tpu.memory_space<vmem>>, vector<16x128xbf16>
    %15 = arith.extf %14 : vector<16x128xbf16> to vector<16x128xf32>
    %16 = arith.addf %15, %13 : vector<16x128xf32>
    %17 = arith.truncf %16 : vector<16x128xf32> to vector<16x128xbf16>
    %c0_13 = arith.constant 0 : index
    %c0_14 = arith.constant 0 : index
    %18 = vector.load %arg6[%c0_13, %c0_14] : memref<16x128xbf16, #tpu.memory_space<vmem>>, vector<16x128xbf16>
    tpu.vector_store %arg6[%c0_13, %c0_14], %17 {strides = array<i32>} : memref<16x128xbf16, #tpu.memory_space<vmem>>, vector<16x128xbf16>,
    return
  }
  func.func @transform_0(%arg0: i32) -> (i32, i32) {
    %c0_i32 = arith.constant 0 : i32
    %c0_i32_0 = arith.constant 0 : i32
    return %arg0, %c0_i32 : i32, i32
  }
  func.func @transform_1(%arg0: i32) -> (i32, i32) {
    %c0_i32 = arith.constant 0 : i32
    %c0_i32_0 = arith.constant 0 : i32
    %c0_i32_1 = arith.constant 0 : i32
    return %c0_i32, %c0_i32_0 : i32, i32
  }
  func.func @transform_2(%arg0: i32) -> (i32, i32) {
    %c0_i32 = arith.constant 0 : i32
    %c0_i32_0 = arith.constant 0 : i32
    %c0_i32_1 = arith.constant 0 : i32
    return %c0_i32, %c0_i32_0 : i32, i32
  }
  func.func @transform_3(%arg0: i32) -> (i32, i32) {
    %c0_i32 = arith.constant 0 : i32
    %c0_i32_0 = arith.constant 0 : i32
    %c0_i32_1 = arith.constant 0 : i32
    return %c0_i32, %c0_i32_0 : i32, i32
  }
  func.func @transform_4(%arg0: i32) -> (i32, i32) {
    %c0_i32 = arith.constant 0 : i32
    %c0_i32_0 = arith.constant 0 : i32
    %c0_i32_1 = arith.constant 0 : i32
    return %c0_i32, %c0_i32_0 : i32, i32
  }
  func.func @transform_5(%arg0: i32) -> (i32, i32) {
    %c0_i32 = arith.constant 0 : i32
    %c0_i32_0 = arith.constant 0 : i32
    return %arg0, %c0_i32 : i32, i32
  }
}

module attributes {stable_mosaic.version = 11 : i64} {
  func.func @mixer_kernel(%arg0: i32, %arg1: memref<16x128xbf16, #tpu.memory_space<vmem>>, %arg2: memref<128x128xbf16, #tpu.memory_space<vmem>>, %arg3: memref<1x128xf32, #tpu.memory_space<vmem>>, %arg4: memref<128x128xbf16, #tpu.memory_space<vmem>>, %arg5: memref<1x128xf32, #tpu.memory_space<vmem>>, %arg6: memref<16x128xbf16, #tpu.memory_space<vmem>>) attributes {dimension_semantics = [#tpu.dimension_semantics<parallel>], iteration_bounds = array<i64: 2>, scalar_prefetch = 0 : i64, scratch_operands = 0 : i64, tpu.core_type = #tpu.core_type<tc>, window_params = [{transform_indices = @transform_0, window_bounds = array<i64: 16, 128>}, {pipeline_mode = #tpu.pipeline_mode<synchronous>, transform_indices = @transform_1, window_bounds = array<i64: 128, 128>}, {pipeline_mode = #tpu.pipeline_mode<synchronous>, transform_indices = @transform_2, window_bounds = array<i64: 1, 128>}, {pipeline_mode = #tpu.pipeline_mode<synchronous>, transform_indices = @transform_3, window_bounds = array<i64: 128, 128>}, {pipeline_mode = #tpu.pipeline_mode<synchronous>, transform_indices = @transform_4, window_bounds = array<i64: 1, 128>}, {transform_indices = @transform_5, window_bounds = array<i64: 16, 128>}]} {
    %c0 = arith.constant 0 : index
    %c0_0 = arith.constant 0 : index
    %0 = vector.load %arg1[%c0, %c0_0] : memref<16x128xbf16, #tpu.memory_space<vmem>>, vector<16x128xbf16>
    %c0_1 = arith.constant 0 : index
    %c0_2 = arith.constant 0 : index
    %1 = vector.load %arg2[%c0_1, %c0_2] : memref<128x128xbf16, #tpu.memory_space<vmem>>, vector<128x128xbf16>
    %cst = arith.constant dense<0.000000e+00> : vector<16x128xf32>
    %2 = tpu.matmul %0, %1, %cst {dimension_numbers = #tpu.dot_dimension_numbers<[1], [0], [0], [1], [0, 0, 1, 1], [], []>} : vector<16x128xbf16>, vector<128x128xbf16>, vector<16x128xf32> -> vector<16x128xf32>
    %c0_3 = arith.constant 0 : index
    %c0_4 = arith.constant 0 : index
    %3 = vector.load %arg3[%c0_3, %c0_4] : memref<1x128xf32, #tpu.memory_space<vmem>>, vector<1x128xf32>
    %4 = vector.broadcast %3 : vector<1x128xf32> to vector<16x128xf32>
    %5 = arith.addf %2, %4 : vector<16x128xf32>
    %cst_5 = arith.constant 0.000000e+00 : f32
    %6 = vector.broadcast %cst_5 : f32 to vector<16x128xf32>
    %7 = arith.maximumf %5, %6 : vector<16x128xf32>
    %8 = arith.truncf %7 : vector<16x128xf32> to vector<16x128xbf16>
    %c0_6 = arith.constant 0 : index
    %c0_7 = arith.constant 0 : index
    %9 = vector.load %arg4[%c0_6, %c0_7] : memref<128x128xbf16, #tpu.memory_space<vmem>>, vector<128x128xbf16>
    %cst_8 = arith.constant dense<0.000000e+00> : vector<16x128xf32>
    %10 = tpu.matmul %8, %9, %cst_8 {dimension_numbers = #tpu.dot_dimension_numbers<[1], [0], [0], [1], [0, 0, 1, 1], [], []>} : vector<16x128xbf16>, vector<128x128xbf16>, vector<16x128xf32> -> vector<16x128xf32>
    %c0_9 = arith.constant 0 : index
    %c0_10 = arith.constant 0 : index
    %11 = vector.load %arg5[%c0_9, %c0_10] : memref<1x128xf32, #tpu.memory_space<vmem>>, vector<1x128xf32>
    %12 = vector.broadcast %11 : vector<1x128xf32> to vector<16x128xf32>
    %13 = arith.addf %10, %12 : vector<16x128xf32>
    %c0_11 = arith.constant 0 : index
    %c0_12 = arith.constant 0 : index
    %14 = vector.load %arg1[%c0_11, %c0_12] : memref<16x128xbf16, #tpu.memory_space<vmem>>, vector<16x128xbf16>
    %15 = arith.extf %14 : vector<16x128xbf16> to vector<16x128xf32>
    %16 = arith.addf %15, %13 : vector<16x128xf32>
    %17 = arith.truncf %16 : vector<16x128xf32> to vector<16x128xbf16>
    %c0_13 = arith.constant 0 : index
    %c0_14 = arith.constant 0 : index
    %18 = vector.load %arg6[%c0_13, %c0_14] : memref<16x128xbf16, #tpu.memory_space<vmem>>, vector<16x128xbf16>
    tpu.vector_store %arg6[%c0_13, %c0_14], %17 {strides = array<i32>} : memref<16x128xbf16, #tpu.memory_space<vmem>>, vector<16x128xbf16>,
    return
  }
  func.func @transform_0(%arg0: i32) -> (i32, i32) {
    %c0_i32 = arith.constant 0 : i32
    %c0_i32_0 = arith.constant 0 : i32
    return %arg0, %c0_i32 : i32, i32
  }
  func.func @transform_1(%arg0: i32) -> (i32, i32) {
    %c0_i32 = arith.constant 0 : i32
    %c0_i32_0 = arith.constant 0 : i32
    %c0_i32_1 = arith.constant 0 : i32
    return %c0_i32, %c0_i32_0 : i32, i32
  }
  func.func @transform_2(%arg0: i32) -> (i32, i32) {
    %c0_i32 = arith.constant 0 : i32
    %c0_i32_0 = arith.constant 0 : i32
    %c0_i32_1 = arith.constant 0 : i32
    return %c0_i32, %c0_i32_0 : i32, i32
  }
  func.func @transform_3(%arg0: i32) -> (i32, i32) {
    %c0_i32 = arith.constant 0 : i32
    %c0_i32_0 = arith.constant 0 : i32
    %c0_i32_1 = arith.constant 0 : i32
    return %c0_i32, %c0_i32_0 : i32, i32
  }
  func.func @transform_4(%arg0: i32) -> (i32, i32) {
    %c0_i32 = arith.constant 0 : i32
    %c0_i32_0 = arith.constant 0 : i32
    %c0_i32_1 = arith.constant 0 : i32
    return %c0_i32, %c0_i32_0 : i32, i32
  }
  func.func @transform_5(%arg0: i32) -> (i32, i32) {
    %c0_i32 = arith.constant 0 : i32
    %c0_i32_0 = arith.constant 0 : i32
    return %arg0, %c0_i32 : i32, i32
  }
}

</mosaic_0001>

<llo_original>
// kernel: feature_mix_mixer_block.1
$region0: #{feature_mix_mixer_block.1}
  #allocation0 [shape = 'u32[]', space=smem, size = 0x4, offset = 0x4, fixed_abs, tag = 'smem constant byte address 0x4 - core index']
  #allocation1 [shape = 'u32[72,128]{1,0:T(1,128)}', space=vmem, size = 0x9000, scoped, tag = 'internal scratch']
  %s0 = inlined_call_operand.vmem [shape: bf16[32,128], index: 0, kind: input, shape index: {}]
  %s1 = inlined_call_operand.vmem [shape: bf16[128,128], index: 1, kind: input, shape index: {}]
  %s2 = inlined_call_operand.vmem [shape: f32[1,128], index: 2, kind: input, shape index: {}]
  %s3 = inlined_call_operand.vmem [shape: bf16[128,128], index: 3, kind: input, shape index: {}]
  %s4 = inlined_call_operand.vmem [shape: f32[1,128], index: 4, kind: input, shape index: {}]
  %s5 = inlined_call_operand.vmem [shape: bf16[32,128], index: 5, kind: output, shape index: {}]
  %s6 = sld [smem:[#allocation0]]
  $region53: #{feature_mix_mixer_block.1} parent=0
    _
  %s8 = ssub.s32 1, %s6
  %s9 = scalar_select 0, %s8, %s6
  loop: start=0, step=1, limit=4
  $region2: #{feature_mix_mixer_block.1} parent=0 // loop_pre_header
    _
  $region3: #{feature_mix_mixer_block.1} parent=0 // loop_header
    %s11 = sphi 0, %s15
    %p12 = scmp.ge.s32.totalorder %s11, 4
    %s21 = sphi 0, %s23
    %s24 = sphi 0, %s21
    %s25 = sphi 0, %s24
    %s41 = sphi 0, %s25
    %s45 = sphi 0, %s45
    %s47 = sphi 0, %s45
    %s48 = sphi 0, %s47
    %s62 = sphi 0, %s48
    %s66 = sphi 0, %s66
    %s68 = sphi 0, %s66
    %s69 = sphi 0, %s68
    %s83 = sphi 0, %s69
    %s87 = sphi 0, %s87
    %s89 = sphi 0, %s87
    %s90 = sphi 0, %s89
    %s104 = sphi 0, %s90
    %s108 = sphi 0, %s108
    %s110 = sphi 0, %s108
    %s111 = sphi 0, %s110
    %s125 = sphi 0, %s111
    %s131 = sphi 0, %s133
    %s134 = sphi 0, %s131
    %s135 = sphi 0, %s134
    %s151 = sphi 0, %s135
  $region4: #{feature_mix_mixer_block.1} parent=0 // loop_header_branch
    %14 = sbr.rel (%p12) target = $region8
  $region5: #{feature_mix_mixer_block.1} parent=0 // loop_body
    %s16 = ssub.s32 %s11, 1
    %s17 = ssub.s32 %s11, 2
    %s18 = sadd.s32 %s11, 1
    %s19 = ssub.s32 %s11, %s18
    %p20 = scmp.eq.s32.totalorder %s19, 0
    %s22 = sadd.s32 %s21, 1
    %s23 = scalar_select %p20, %s21, %s22
    %p26 = pneg %p20
    %p27 = scmp.eq.s32.totalorder %s11, 1
    %p28 = por %p26, %p27
    %p29 = scmp.ne.s32.totalorder %s21, %s24
    %p30 = scmp.eq.s32.totalorder %s11, 0
    %p31 = por %p29, %p30
    %p32 = scmp.ne.s32.totalorder %s21, %s24
    %p33 = scmp.eq.s32.totalorder %s16, 1
    %p34 = por %p32, %p33
    %p35 = scmp.ne.s32.totalorder %s24, %s25
    %p36 = scmp.eq.s32.totalorder %s16, 0
    %p37 = por %p35, %p36
    %p38 = scmp.ne.s32.totalorder %s24, %s25
    %p39 = scmp.eq.s32.totalorder %s17, 1
    %p40 = por %p38, %p39
    %p42 = scmp.ne.s32.totalorder %s25, %s41
    %p43 = scmp.eq.s32.totalorder %s17, 0
    %p44 = por %p42, %p43
    %s46 = sadd.s32 %s45, 1
    %p49 = scmp.eq.s32.totalorder %s11, 1
    %p50 = scmp.ne.s32.totalorder %s45, %s47
    %p51 = scmp.eq.s32.totalorder %s11, 0
    %p52 = por %p50, %p51
    %p53 = scmp.ne.s32.totalorder %s45, %s47
    %p54 = scmp.eq.s32.totalorder %s16, 1
    %p55 = por %p53, %p54
    %p56 = scmp.ne.s32.totalorder %s47, %s48
    %p57 = scmp.eq.s32.totalorder %s16, 0
    %p58 = por %p56, %p57
    %p59 = scmp.ne.s32.totalorder %s47, %s48
    %p60 = scmp.eq.s32.totalorder %s17, 1
    %p61 = por %p59, %p60
    %p63 = scmp.ne.s32.totalorder %s48, %s62
    %p64 = scmp.eq.s32.totalorder %s17, 0
    %p65 = por %p63, %p64
    %s67 = sadd.s32 %s66, 1
    %p70 = scmp.eq.s32.totalorder %s11, 1
    %p71 = scmp.ne.s32.totalorder %s66, %s68
    %p72 = scmp.eq.s32.totalorder %s11, 0
    %p73 = por %p71, %p72
    %p74 = scmp.ne.s32.totalorder %s66, %s68
    %p75 = scmp.eq.s32.totalorder %s16, 1
    %p76 = por %p74, %p75
    %p77 = scmp.ne.s32.totalorder %s68, %s69
    %p78 = scmp.eq.s32.totalorder %s16, 0
    %p79 = por %p77, %p78
    %p80 = scmp.ne.s32.totalorder %s68, %s69
    %p81 = scmp.eq.s32.totalorder %s17, 1
    %p82 = por %p80, %p81
    %p84 = scmp.ne.s32.totalorder %s69, %s83
    %p85 = scmp.eq.s32.totalorder %s17, 0
    %p86 = por %p84, %p85
    %s88 = sadd.s32 %s87, 1
    %p91 = scmp.eq.s32.totalorder %s11, 1
    %p92 = scmp.ne.s32.totalorder %s87, %s89
    %p93 = scmp.eq.s32.totalorder %s11, 0
    %p94 = por %p92, %p93
    %p95 = scmp.ne.s32.totalorder %s87, %s89
    %p96 = scmp.eq.s32.totalorder %s16, 1
    %p97 = por %p95, %p96
    %p98 = scmp.ne.s32.totalorder %s89, %s90
    %p99 = scmp.eq.s32.totalorder %s16, 0
    %p100 = por %p98, %p99
    %p101 = scmp.ne.s32.totalorder %s89, %s90
    %p102 = scmp.eq.s32.totalorder %s17, 1
    %p103 = por %p101, %p102
    %p105 = scmp.ne.s32.totalorder %s90, %s104
    %p106 = scmp.eq.s32.totalorder %s17, 0
    %p107 = por %p105, %p106
    %s109 = sadd.s32 %s108, 1
    %p112 = scmp.eq.s32.totalorder %s11, 1
    %p113 = scmp.ne.s32.totalorder %s108, %s110
    %p114 = scmp.eq.s32.totalorder %s11, 0
    %p115 = por %p113, %p114
    %p116 = scmp.ne.s32.totalorder %s108, %s110
    %p117 = scmp.eq.s32.totalorder %s16, 1
    %p118 = por %p116, %p117
    %p119 = scmp.ne.s32.totalorder %s110, %s111
    %p120 = scmp.eq.s32.totalorder %s16, 0
    %p121 = por %p119, %p120
    %p122 = scmp.ne.s32.totalorder %s110, %s111
    %p123 = scmp.eq.s32.totalorder %s17, 1
    %p124 = por %p122, %p123
    %p126 = scmp.ne.s32.totalorder %s111, %s125
    %p127 = scmp.eq.s32.totalorder %s17, 0
    %p128 = por %p126, %p127
    %s129 = ssub.s32 %s11, %s18
    %p130 = scmp.eq.s32.totalorder %s129, 0
    %s132 = sadd.s32 %s131, 1
    %s133 = scalar_select %p130, %s131, %s132
    %p136 = pneg %p130
    %p137 = scmp.eq.s32.totalorder %s11, 1
    %p138 = por %p136, %p137
    %p139 = scmp.ne.s32.totalorder %s131, %s134
    %p140 = scmp.eq.s32.totalorder %s11, 0
    %p141 = por %p139, %p140
    %p142 = scmp.ne.s32.totalorder %s131, %s134
    %p143 = scmp.eq.s32.totalorder %s16, 1
    %p144 = por %p142, %p143
    %p145 = scmp.ne.s32.totalorder %s134, %s135
    %p146 = scmp.eq.s32.totalorder %s16, 0
    %p147 = por %p145, %p146
    %p148 = scmp.ne.s32.totalorder %s134, %s135
    %p149 = scmp.eq.s32.totalorder %s17, 1
    %p150 = por %p148, %p149
    %p152 = scmp.ne.s32.totalorder %s135, %s151
    %p153 = scmp.eq.s32.totalorder %s17, 0
    %p154 = por %p152, %p153
    %p155 = scmp.le.s32.totalorder 1, %s11
    %p156 = scmp.lt.s32.totalorder %s11, 3
    %p157 = pnand %p155, %p156
    %p158 = pneg %p157
    // Predicated region
    $region9: #{feature_mix_mixer_block.1} parent=5 // pred_check
      _
    $region10: #{feature_mix_mixer_block.1} parent=5 // pred_check_branch
      %160 = sbr.rel (%p157) target = $region12
    $region11: #{feature_mix_mixer_block.1} parent=5 // pred_region
      %s161 = ssub.s32 %s11, 1
      // Predicated region
      $region13: #{feature_mix_mixer_block.1} parent=11 // pred_check
        %p162 = pneg %p58
      $region14: #{feature_mix_mixer_block.1} parent=11 // pred_check_branch
        %164 = sbr.rel (%p162) target = $region16
      $region15: #{feature_mix_mixer_block.1} parent=11 // pred_region
        _
      $region16: #{feature_mix_mixer_block.1} parent=11 // pred_fallthru
        _
      // Predicated region
      $region17: #{feature_mix_mixer_block.1} parent=11 // pred_check
        %p165 = pneg %p79
      $region18: #{feature_mix_mixer_block.1} parent=11 // pred_check_branch
        %167 = sbr.rel (%p165) target = $region20
      $region19: #{feature_mix_mixer_block.1} parent=11 // pred_region
        _
      $region20: #{feature_mix_mixer_block.1} parent=11 // pred_fallthru
        _
      // Predicated region
      $region21: #{feature_mix_mixer_block.1} parent=11 // pred_check
        %p168 = pneg %p100
      $region22: #{feature_mix_mixer_block.1} parent=11 // pred_check_branch
        %170 = sbr.rel (%p168) target = $region24
      $region23: #{feature_mix_mixer_block.1} parent=11 // pred_region
        _
      $region24: #{feature_mix_mixer_block.1} parent=11 // pred_fallthru
        _
      // Predicated region
      $region25: #{feature_mix_mixer_block.1} parent=11 // pred_check
        %p171 = pneg %p121
      $region26: #{feature_mix_mixer_block.1} parent=11 // pred_check_branch
        %173 = sbr.rel (%p171) target = $region28
      $region27: #{feature_mix_mixer_block.1} parent=11 // pred_region
        _
      $region28: #{feature_mix_mixer_block.1} parent=11 // pred_fallthru
        _
    $region12: #{feature_mix_mixer_block.1} parent=5 // pred_fallthru
      _
    %p174 = scmp.lt.s32.totalorder %s11, 2
    // Predicated region
    $region29: #{feature_mix_mixer_block.1} parent=5 // pred_check
      %p175 = pneg %p174
    $region30: #{feature_mix_mixer_block.1} parent=5 // pred_check_branch
      %177 = sbr.rel (%p175) target = $region32
    $region31: #{feature_mix_mixer_block.1} parent=5 // pred_region
      // Predicated region
      $region33: #{feature_mix_mixer_block.1} parent=31 // pred_check
        %p178 = pneg %p31
      $region34: #{feature_mix_mixer_block.1} parent=31 // pred_check_branch
        %180 = sbr.rel (%p178) target = $region36
      $region35: #{feature_mix_mixer_block.1} parent=31 // pred_region
        %s181 = smul.u32 2, %s11
        %p182 = scmp.lt.s32.totalorder %s181, 3
        %s183 = scalar_select %p182, %s181, 3
        %s184 = smul.addr %s183, 4
        %s185 = scalar_lea.vmem %s0, %s184
        %s186 = smul.u32 2, %s11
      $region36: #{feature_mix_mixer_block.1} parent=31 // pred_fallthru
        _
    $region32: #{feature_mix_mixer_block.1} parent=5 // pred_fallthru
      _
    %p187 = scmp.le.s32.totalorder 1, %s11
    %p188 = scmp.lt.s32.totalorder %s11, 3
    %p189 = pnand %p187, %p188
    %p190 = pneg %p189
    // Predicated region
    $region37: #{feature_mix_mixer_block.1} parent=5 // pred_check
      _
    $region38: #{feature_mix_mixer_block.1} parent=5 // pred_check_branch
      %192 = sbr.rel (%p189) target = $region40
    $region39: #{feature_mix_mixer_block.1} parent=5 // pred_region
      %s193 = ssub.s32 %s11, 1
      %s194 = smul.u32 2, %s16
      %p195 = scmp.lt.s32.totalorder %s194, 3
      %s196 = scalar_select %p195, %s194, 3
      %s197 = smul.addr %s196, 4
      %s198 = scalar_lea.vmem %s0, %s197
      %p199 = pneg %p37
      %p200 = pneg %p34
      %p201 = pneg %p58
      %p202 = pneg %p55
      %p203 = pneg %p79
      %p204 = pneg %p76
      %p205 = pneg %p100
      %p206 = pneg %p97
      %p207 = pneg %p121
      %p208 = pneg %p118
      %p209 = pneg %p147
      %p210 = pneg %p144
      %s211 = smul.u32 2, %s16
      %p212 = scmp.lt.s32.totalorder %s211, 3
      %s213 = scalar_select %p212, %s211, 3
      %s214 = smul.addr %s213, 4
      %s215 = scalar_lea.vmem %s5, %s214
      %s216 = smul.u32 2, %s16
      %p217 = scmp.lt.s32.totalorder %s216, 3
      %s218 = scalar_select %p217, %s216, 3
      %s219 = smul.addr %s218, 4
      %s220 = scalar_lea.vmem %s0, %s219
      %s221 = smul.u32 2, %s16
      %s222 = smul.u32 2, %s16
      %p223 = scmp.lt.s32.totalorder %s222, 3
      %s224 = scalar_select %p223, %s222, 3
      %s225 = smul.addr %s224, 4
      %s226 = scalar_lea.vmem %s5, %s225
      %s227 = smul.u32 2, %s16
      %v228 = vld [vmem:[%s220] sm:$0xf]
      %v229 = vld [vmem:[%s220 + $0x4] sm:$0xf]
      %v230 = vld [vmem:[%s1] sm:$0xf]
      %v231 = vld [vmem:[%s1 + $0x4] sm:$0xf]
      %v232 = vld [vmem:[%s1 + $0x8] sm:$0xf]
      %v233 = vld [vmem:[%s1 + $0xc] sm:$0xf]
      %v234 = vld [vmem:[%s1 + $0x10] sm:$0xf]
      %v235 = vld [vmem:[%s1 + $0x14] sm:$0xf]
      %v236 = vld [vmem:[%s1 + $0x18] sm:$0xf]
      %v237 = vld [vmem:[%s1 + $0x1c] sm:$0xf]
      %v238 = vld [vmem:[%s1 + $0x20] sm:$0xf]
      %v239 = vld [vmem:[%s1 + $0x24] sm:$0xf]
      %v240 = vld [vmem:[%s1 + $0x28] sm:$0xf]
      %v241 = vld [vmem:[%s1 + $0x2c] sm:$0xf]
      %v242 = vld [vmem:[%s1 + $0x30] sm:$0xf]
      %v243 = vld [vmem:[%s1 + $0x34] sm:$0xf]
      %v244 = vld [vmem:[%s1 + $0x38] sm:$0xf]
      %v245 = vld [vmem:[%s1 + $0x3c] sm:$0xf]
      %v246 = vld [vmem:[%s2] sm:$0x1]
      %v248 = vperm.slane %v246, 0
      %v252 = vunpack.c.l.b16 %v228
      %v253 = vunpack.c.l.b16 %v229
      %v254 = vpack.c.b16 %v253, %v252
      %v272 = vunpack.c.l.b16 %v230
      %v273 = vunpack.c.l.b16 %v231
      %v274 = vunpack.c.l.b16 %v232
      %v275 = vunpack.c.l.b16 %v233
      %v276 = vunpack.c.l.b16 %v234
      %v277 = vunpack.c.l.b16 %v235
      %v278 = vunpack.c.l.b16 %v236
      %v279 = vunpack.c.l.b16 %v237
      %v280 = vunpack.c.l.b16 %v238
      %v281 = vunpack.c.l.b16 %v239
      %v282 = vunpack.c.l.b16 %v240
      %v283 = vunpack.c.l.b16 %v241
      %v284 = vunpack.c.l.b16 %v242
      %v285 = vunpack.c.l.b16 %v243
      %v286 = vunpack.c.l.b16 %v244
      %v287 = vunpack.c.l.b16 %v245
      %v288 = vpack.c.b16 %v273, %v272
      %v289 = vpack.c.b16 %v275, %v274
      %v290 = vpack.c.b16 %v277, %v276
      %v291 = vpack.c.b16 %v279, %v278
      %v292 = vpack.c.b16 %v281, %v280
      %v293 = vpack.c.b16 %v283, %v282
      %v294 = vpack.c.b16 %v285, %v284
      %v295 = vpack.c.b16 %v287, %v286
      %304 = vmatpush.bf16.msra.mxu0 %v295
      %305 = vmatpush.bf16.msra.mxu0 %v294
      %306 = vmatpush.bf16.msra.mxu0 %v293
      %307 = vmatpush.bf16.msra.mxu0 %v292
      %308 = vmatpush.bf16.msra.mxu0 %v291
      %309 = vmatpush.bf16.msra.mxu0 %v290
      %310 = vmatpush.bf16.msra.mxu0 %v289
      %311 = vmatpush.bf16.msra.mxu0 %v288
      %312 = vmatmul.bf16.gmra.mxu0 %v254
      %v313 = vpop.f32.mrf.mxu0
      %v314 = vadd.f32 %v248, %v313
      %v315 = vpop.f32.mrf.mxu0
      %v316 = vadd.f32 %v248, %v315
      %317 = vdwg.mxu0
      %v318 = vmax.f32 %v314, 0.0
      %v319 = vmax.f32 %v316, 0.0
      %v320 = vpack.c.bf16 %v319, %v318
      %v321 = vld [vmem:[%s3] sm:$0xf]
      %v322 = vld [vmem:[%s3 + $0x4] sm:$0xf]
      %v323 = vld [vmem:[%s3 + $0x8] sm:$0xf]
      %v324 = vld [vmem:[%s3 + $0xc] sm:$0xf]
      %v325 = vld [vmem:[%s3 + $0x10] sm:$0xf]
      %v326 = vld [vmem:[%s3 + $0x14] sm:$0xf]
      %v327 = vld [vmem:[%s3 + $0x18] sm:$0xf]
      %v328 = vld [vmem:[%s3 + $0x1c] sm:$0xf]
      %v329 = vld [vmem:[%s3 + $0x20] sm:$0xf]
      %v330 = vld [vmem:[%s3 + $0x24] sm:$0xf]
      %v331 = vld [vmem:[%s3 + $0x28] sm:$0xf]
      %v332 = vld [vmem:[%s3 + $0x2c] sm:$0xf]
      %v333 = vld [vmem:[%s3 + $0x30] sm:$0xf]
      %v334 = vld [vmem:[%s3 + $0x34] sm:$0xf]
      %v335 = vld [vmem:[%s3 + $0x38] sm:$0xf]
      %v336 = vld [vmem:[%s3 + $0x3c] sm:$0xf]
      %v337 = vld [vmem:[%s4] sm:$0x1]
      %v339 = vperm.slane %v337, 0
      %v357 = vunpack.c.l.b16 %v321
      %v358 = vunpack.c.l.b16 %v322
      %v359 = vunpack.c.l.b16 %v323
      %v360 = vunpack.c.l.b16 %v324
      %v361 = vunpack.c.l.b16 %v325
      %v362 = vunpack.c.l.b16 %v326
      %v363 = vunpack.c.l.b16 %v327
      %v364 = vunpack.c.l.b16 %v328
      %v365 = vunpack.c.l.b16 %v329
      %v366 = vunpack.c.l.b16 %v330
      %v367 = vunpack.c.l.b16 %v331
      %v368 = vunpack.c.l.b16 %v332
      %v369 = vunpack.c.l.b16 %v333
      %v370 = vunpack.c.l.b16 %v334
      %v371 = vunpack.c.l.b16 %v335
      %v372 = vunpack.c.l.b16 %v336
      %v373 = vpack.c.b16 %v358, %v357
      %v374 = vpack.c.b16 %v360, %v359
      %v375 = vpack.c.b16 %v362, %v361
      %v376 = vpack.c.b16 %v364, %v363
      %v377 = vpack.c.b16 %v366, %v365
      %v378 = vpack.c.b16 %v368, %v367
      %v379 = vpack.c.b16 %v370, %v369
      %v380 = vpack.c.b16 %v372, %v371
      %389 = vmatpush.bf16.msra.mxu0 %v380
      %390 = vmatpush.bf16.msra.mxu0 %v379
      %391 = vmatpush.bf16.msra.mxu0 %v378
      %392 = vmatpush.bf16.msra.mxu0 %v377
      %393 = vmatpush.bf16.msra.mxu0 %v376
      %394 = vmatpush.bf16.msra.mxu0 %v375
      %395 = vmatpush.bf16.msra.mxu0 %v374
      %396 = vmatpush.bf16.msra.mxu0 %v373
      %397 = vmatmul.bf16.gmra.mxu0 %v320
      %v398 = vpop.f32.mrf.mxu0
      %v399 = vadd.f32 %v339, %v398
      %v400 = vpop.f32.mrf.mxu0
      %v401 = vadd.f32 %v339, %v400
      %402 = vdwg.mxu0
      %v403 = vunpack.c.l.bf16 %v228
      %v404 = vunpack.c.l.bf16 %v229
      %v405 = vadd.f32 %v403, %v399
      %v406 = vadd.f32 %v404, %v401
      %v407 = vpack.c.bf16 %v405, %v405
      %v408 = vpack.c.bf16 %v406, %v406
      %409 = vst [vmem:[%s226] sm:$0xf] %v407
      %410 = vst [vmem:[%s226 + $0x4] sm:$0xf] %v408
      %s411 = smul.u32 2, %s16
      %p412 = scmp.lt.s32.totalorder %s411, 3
      %s413 = scalar_select %p412, %s411, 3
      %s414 = smul.addr %s413, 4
      %s415 = scalar_lea.vmem %s5, %s414
      // Predicated region
      $region41: #{feature_mix_mixer_block.1} parent=39 // pred_check
        %p416 = pneg %p144
      $region42: #{feature_mix_mixer_block.1} parent=39 // pred_check_branch
        %418 = sbr.rel (%p416) target = $region44
      $region43: #{feature_mix_mixer_block.1} parent=39 // pred_region
        %s419 = smul.u32 2, %s16
      $region44: #{feature_mix_mixer_block.1} parent=39 // pred_fallthru
        _
    $region40: #{feature_mix_mixer_block.1} parent=5 // pred_fallthru
      _
    %p420 = scmp.le.s32.totalorder 2, %s11
    // Predicated region
    $region45: #{feature_mix_mixer_block.1} parent=5 // pred_check
      %p421 = pneg %p420
    $region46: #{feature_mix_mixer_block.1} parent=5 // pred_check_branch
      %423 = sbr.rel (%p421) target = $region48
    $region47: #{feature_mix_mixer_block.1} parent=5 // pred_region
      %s424 = ssub.s32 %s11, 2
      // Predicated region
      $region49: #{feature_mix_mixer_block.1} parent=47 // pred_check
        %p425 = pneg %p150
      $region50: #{feature_mix_mixer_block.1} parent=47 // pred_check_branch
        %427 = sbr.rel (%p425) target = $region52
      $region51: #{feature_mix_mixer_block.1} parent=47 // pred_region
        %s428 = smul.u32 2, %s17
        %p429 = scmp.lt.s32.totalorder %s428, 3
        %s430 = scalar_select %p429, %s428, 3
        %s431 = smul.addr %s430, 4
        %s432 = scalar_lea.vmem %s5, %s431
      $region52: #{feature_mix_mixer_block.1} parent=47 // pred_fallthru
        _
    $region48: #{feature_mix_mixer_block.1} parent=5 // pred_fallthru
      _
  $region6: #{feature_mix_mixer_block.1} parent=0 // loop_footer
    %s15 = sadd.s32 1, %s11
  $region7: #{feature_mix_mixer_block.1} parent=0 // loop_footer_branch
    %10 = sbr.rel target = $region3
  $region8: #{feature_mix_mixer_block.1} parent=0 // loop_exit
    _

// kernel: feature_mix_mixer_block.1
$region0: #{feature_mix_mixer_block.1}
  #allocation0 [shape = 'u32[]', space=smem, size = 0x4, offset = 0x4, fixed_abs, tag = 'smem constant byte address 0x4 - core index']
  #allocation1 [shape = 'u32[72,128]{1,0:T(1,128)}', space=vmem, size = 0x9000, scoped, tag = 'internal scratch']
  %s0 = inlined_call_operand.vmem [shape: bf16[32,128], index: 0, kind: input, shape index: {}]
  %s1 = inlined_call_operand.vmem [shape: bf16[128,128], index: 1, kind: input, shape index: {}]
  %s2 = inlined_call_operand.vmem [shape: f32[1,128], index: 2, kind: input, shape index: {}]
  %s3 = inlined_call_operand.vmem [shape: bf16[128,128], index: 3, kind: input, shape index: {}]
  %s4 = inlined_call_operand.vmem [shape: f32[1,128], index: 4, kind: input, shape index: {}]
  %s5 = inlined_call_operand.vmem [shape: bf16[32,128], index: 5, kind: output, shape index: {}]
  %s6 = sld [smem:[#allocation0]]
  $region53: #{feature_mix_mixer_block.1} parent=0
    _
  %s8 = ssub.s32 1, %s6
  %s9 = scalar_select 0, %s8, %s6
  loop: start=0, step=1, limit=4
  $region2: #{feature_mix_mixer_block.1} parent=0 // loop_pre_header
    _
  $region3: #{feature_mix_mixer_block.1} parent=0 // loop_header
    %s11 = sphi 0, %s15
    %p12 = scmp.ge.s32.totalorder %s11, 4
    %s21 = sphi 0, %s23
    %s24 = sphi 0, %s21
    %s25 = sphi 0, %s24
    %s41 = sphi 0, %s25
    %s45 = sphi 0, %s45
    %s47 = sphi 0, %s45
    %s48 = sphi 0, %s47
    %s62 = sphi 0, %s48
    %s66 = sphi 0, %s66
    %s68 = sphi 0, %s66
    %s69 = sphi 0, %s68
    %s83 = sphi 0, %s69
    %s87 = sphi 0, %s87
    %s89 = sphi 0, %s87
    %s90 = sphi 0, %s89
    %s104 = sphi 0, %s90
    %s108 = sphi 0, %s108
    %s110 = sphi 0, %s108
    %s111 = sphi 0, %s110
    %s125 = sphi 0, %s111
    %s131 = sphi 0, %s133
    %s134 = sphi 0, %s131
    %s135 = sphi 0, %s134
    %s151 = sphi 0, %s135
  $region4: #{feature_mix_mixer_block.1} parent=0 // loop_header_branch
    %14 = sbr.rel (%p12) target = $region8
  $region5: #{feature_mix_mixer_block.1} parent=0 // loop_body
    %s16 = ssub.s32 %s11, 1
    %s17 = ssub.s32 %s11, 2
    %s18 = sadd.s32 %s11, 1
    %s19 = ssub.s32 %s11, %s18
    %p20 = scmp.eq.s32.totalorder %s19, 0
    %s22 = sadd.s32 %s21, 1
    %s23 = scalar_select %p20, %s21, %s22
    %p26 = pneg %p20
    %p27 = scmp.eq.s32.totalorder %s11, 1
    %p28 = por %p26, %p27
    %p29 = scmp.ne.s32.totalorder %s21, %s24
    %p30 = scmp.eq.s32.totalorder %s11, 0
    %p31 = por %p29, %p30
    %p32 = scmp.ne.s32.totalorder %s21, %s24
    %p33 = scmp.eq.s32.totalorder %s16, 1
    %p34 = por %p32, %p33
    %p35 = scmp.ne.s32.totalorder %s24, %s25
    %p36 = scmp.eq.s32.totalorder %s16, 0
    %p37 = por %p35, %p36
    %p38 = scmp.ne.s32.totalorder %s24, %s25
    %p39 = scmp.eq.s32.totalorder %s17, 1
    %p40 = por %p38, %p39
    %p42 = scmp.ne.s32.totalorder %s25, %s41
    %p43 = scmp.eq.s32.totalorder %s17, 0
    %p44 = por %p42, %p43
    %s46 = sadd.s32 %s45, 1
    %p49 = scmp.eq.s32.totalorder %s11, 1
    %p50 = scmp.ne.s32.totalorder %s45, %s47
    %p51 = scmp.eq.s32.totalorder %s11, 0
    %p52 = por %p50, %p51
    %p53 = scmp.ne.s32.totalorder %s45, %s47
    %p54 = scmp.eq.s32.totalorder %s16, 1
    %p55 = por %p53, %p54
    %p56 = scmp.ne.s32.totalorder %s47, %s48
    %p57 = scmp.eq.s32.totalorder %s16, 0
    %p58 = por %p56, %p57
    %p59 = scmp.ne.s32.totalorder %s47, %s48
    %p60 = scmp.eq.s32.totalorder %s17, 1
    %p61 = por %p59, %p60
    %p63 = scmp.ne.s32.totalorder %s48, %s62
    %p64 = scmp.eq.s32.totalorder %s17, 0
    %p65 = por %p63, %p64
    %s67 = sadd.s32 %s66, 1
    %p70 = scmp.eq.s32.totalorder %s11, 1
    %p71 = scmp.ne.s32.totalorder %s66, %s68
    %p72 = scmp.eq.s32.totalorder %s11, 0
    %p73 = por %p71, %p72
    %p74 = scmp.ne.s32.totalorder %s66, %s68
    %p75 = scmp.eq.s32.totalorder %s16, 1
    %p76 = por %p74, %p75
    %p77 = scmp.ne.s32.totalorder %s68, %s69
    %p78 = scmp.eq.s32.totalorder %s16, 0
    %p79 = por %p77, %p78
    %p80 = scmp.ne.s32.totalorder %s68, %s69
    %p81 = scmp.eq.s32.totalorder %s17, 1
    %p82 = por %p80, %p81
    %p84 = scmp.ne.s32.totalorder %s69, %s83
    %p85 = scmp.eq.s32.totalorder %s17, 0
    %p86 = por %p84, %p85
    %s88 = sadd.s32 %s87, 1
    %p91 = scmp.eq.s32.totalorder %s11, 1
    %p92 = scmp.ne.s32.totalorder %s87, %s89
    %p93 = scmp.eq.s32.totalorder %s11, 0
    %p94 = por %p92, %p93
    %p95 = scmp.ne.s32.totalorder %s87, %s89
    %p96 = scmp.eq.s32.totalorder %s16, 1
    %p97 = por %p95, %p96
    %p98 = scmp.ne.s32.totalorder %s89, %s90
    %p99 = scmp.eq.s32.totalorder %s16, 0
    %p100 = por %p98, %p99
    %p101 = scmp.ne.s32.totalorder %s89, %s90
    %p102 = scmp.eq.s32.totalorder %s17, 1
    %p103 = por %p101, %p102
    %p105 = scmp.ne.s32.totalorder %s90, %s104
    %p106 = scmp.eq.s32.totalorder %s17, 0
    %p107 = por %p105, %p106
    %s109 = sadd.s32 %s108, 1
    %p112 = scmp.eq.s32.totalorder %s11, 1
    %p113 = scmp.ne.s32.totalorder %s108, %s110
    %p114 = scmp.eq.s32.totalorder %s11, 0
    %p115 = por %p113, %p114
    %p116 = scmp.ne.s32.totalorder %s108, %s110
    %p117 = scmp.eq.s32.totalorder %s16, 1
    %p118 = por %p116, %p117
    %p119 = scmp.ne.s32.totalorder %s110, %s111
    %p120 = scmp.eq.s32.totalorder %s16, 0
    %p121 = por %p119, %p120
    %p122 = scmp.ne.s32.totalorder %s110, %s111
    %p123 = scmp.eq.s32.totalorder %s17, 1
    %p124 = por %p122, %p123
    %p126 = scmp.ne.s32.totalorder %s111, %s125
    %p127 = scmp.eq.s32.totalorder %s17, 0
    %p128 = por %p126, %p127
    %s129 = ssub.s32 %s11, %s18
    %p130 = scmp.eq.s32.totalorder %s129, 0
    %s132 = sadd.s32 %s131, 1
    %s133 = scalar_select %p130, %s131, %s132
    %p136 = pneg %p130
    %p137 = scmp.eq.s32.totalorder %s11, 1
    %p138 = por %p136, %p137
    %p139 = scmp.ne.s32.totalorder %s131, %s134
    %p140 = scmp.eq.s32.totalorder %s11, 0
    %p141 = por %p139, %p140
    %p142 = scmp.ne.s32.totalorder %s131, %s134
    %p143 = scmp.eq.s32.totalorder %s16, 1
    %p144 = por %p142, %p143
    %p145 = scmp.ne.s32.totalorder %s134, %s135
    %p146 = scmp.eq.s32.totalorder %s16, 0
    %p147 = por %p145, %p146
    %p148 = scmp.ne.s32.totalorder %s134, %s135
    %p149 = scmp.eq.s32.totalorder %s17, 1
    %p150 = por %p148, %p149
    %p152 = scmp.ne.s32.totalorder %s135, %s151
    %p153 = scmp.eq.s32.totalorder %s17, 0
    %p154 = por %p152, %p153
    %p155 = scmp.le.s32.totalorder 1, %s11
    %p156 = scmp.lt.s32.totalorder %s11, 3
    %p157 = pnand %p155, %p156
    %p158 = pneg %p157
    // Predicated region
    $region9: #{feature_mix_mixer_block.1} parent=5 // pred_check
      _
    $region10: #{feature_mix_mixer_block.1} parent=5 // pred_check_branch
      %160 = sbr.rel (%p157) target = $region12
    $region11: #{feature_mix_mixer_block.1} parent=5 // pred_region
      %s161 = ssub.s32 %s11, 1
      // Predicated region
      $region13: #{feature_mix_mixer_block.1} parent=11 // pred_check
        %p162 = pneg %p58
      $region14: #{feature_mix_mixer_block.1} parent=11 // pred_check_branch
        %164 = sbr.rel (%p162) target = $region16
      $region15: #{feature_mix_mixer_block.1} parent=11 // pred_region
        _
      $region16: #{feature_mix_mixer_block.1} parent=11 // pred_fallthru
        _
      // Predicated region
      $region17: #{feature_mix_mixer_block.1} parent=11 // pred_check
        %p165 = pneg %p79
      $region18: #{feature_mix_mixer_block.1} parent=11 // pred_check_branch
        %167 = sbr.rel (%p165) target = $region20
      $region19: #{feature_mix_mixer_block.1} parent=11 // pred_region
        _
      $region20: #{feature_mix_mixer_block.1} parent=11 // pred_fallthru
        _
      // Predicated region
      $region21: #{feature_mix_mixer_block.1} parent=11 // pred_check
        %p168 = pneg %p100
      $region22: #{feature_mix_mixer_block.1} parent=11 // pred_check_branch
        %170 = sbr.rel (%p168) target = $region24
      $region23: #{feature_mix_mixer_block.1} parent=11 // pred_region
        _
      $region24: #{feature_mix_mixer_block.1} parent=11 // pred_fallthru
        _
      // Predicated region
      $region25: #{feature_mix_mixer_block.1} parent=11 // pred_check
        %p171 = pneg %p121
      $region26: #{feature_mix_mixer_block.1} parent=11 // pred_check_branch
        %173 = sbr.rel (%p171) target = $region28
      $region27: #{feature_mix_mixer_block.1} parent=11 // pred_region
        _
      $region28: #{feature_mix_mixer_block.1} parent=11 // pred_fallthru
        _
    $region12: #{feature_mix_mixer_block.1} parent=5 // pred_fallthru
      _
    %p174 = scmp.lt.s32.totalorder %s11, 2
    // Predicated region
    $region29: #{feature_mix_mixer_block.1} parent=5 // pred_check
      %p175 = pneg %p174
    $region30: #{feature_mix_mixer_block.1} parent=5 // pred_check_branch
      %177 = sbr.rel (%p175) target = $region32
    $region31: #{feature_mix_mixer_block.1} parent=5 // pred_region
      // Predicated region
      $region33: #{feature_mix_mixer_block.1} parent=31 // pred_check
        %p178 = pneg %p31
      $region34: #{feature_mix_mixer_block.1} parent=31 // pred_check_branch
        %180 = sbr.rel (%p178) target = $region36
      $region35: #{feature_mix_mixer_block.1} parent=31 // pred_region
        %s181 = smul.u32 2, %s11
        %p182 = scmp.lt.s32.totalorder %s181, 3
        %s183 = scalar_select %p182, %s181, 3
        %s184 = smul.addr %s183, 4
        %s185 = scalar_lea.vmem %s0, %s184
        %s186 = smul.u32 2, %s11
      $region36: #{feature_mix_mixer_block.1} parent=31 // pred_fallthru
        _
    $region32: #{feature_mix_mixer_block.1} parent=5 // pred_fallthru
      _
    %p187 = scmp.le.s32.totalorder 1, %s11
    %p188 = scmp.lt.s32.totalorder %s11, 3
    %p189 = pnand %p187, %p188
    %p190 = pneg %p189
    // Predicated region
    $region37: #{feature_mix_mixer_block.1} parent=5 // pred_check
      _
    $region38: #{feature_mix_mixer_block.1} parent=5 // pred_check_branch
      %192 = sbr.rel (%p189) target = $region40
    $region39: #{feature_mix_mixer_block.1} parent=5 // pred_region
      %s193 = ssub.s32 %s11, 1
      %s194 = smul.u32 2, %s16
      %p195 = scmp.lt.s32.totalorder %s194, 3
      %s196 = scalar_select %p195, %s194, 3
      %s197 = smul.addr %s196, 4
      %s198 = scalar_lea.vmem %s0, %s197
      %p199 = pneg %p37
      %p200 = pneg %p34
      %p201 = pneg %p58
      %p202 = pneg %p55
      %p203 = pneg %p79
      %p204 = pneg %p76
      %p205 = pneg %p100
      %p206 = pneg %p97
      %p207 = pneg %p121
      %p208 = pneg %p118
      %p209 = pneg %p147
      %p210 = pneg %p144
      %s211 = smul.u32 2, %s16
      %p212 = scmp.lt.s32.totalorder %s211, 3
      %s213 = scalar_select %p212, %s211, 3
      %s214 = smul.addr %s213, 4
      %s215 = scalar_lea.vmem %s5, %s214
      %s216 = smul.u32 2, %s16
      %p217 = scmp.lt.s32.totalorder %s216, 3
      %s218 = scalar_select %p217, %s216, 3
      %s219 = smul.addr %s218, 4
      %s220 = scalar_lea.vmem %s0, %s219
      %s221 = smul.u32 2, %s16
      %s222 = smul.u32 2, %s16
      %p223 = scmp.lt.s32.totalorder %s222, 3
      %s224 = scalar_select %p223, %s222, 3
      %s225 = smul.addr %s224, 4
      %s226 = scalar_lea.vmem %s5, %s225
      %s227 = smul.u32 2, %s16
      %v228 = vld [vmem:[%s220] sm:$0xf]
      %v229 = vld [vmem:[%s220 + $0x4] sm:$0xf]
      %v230 = vld [vmem:[%s1] sm:$0xf]
      %v231 = vld [vmem:[%s1 + $0x4] sm:$0xf]
      %v232 = vld [vmem:[%s1 + $0x8] sm:$0xf]
      %v233 = vld [vmem:[%s1 + $0xc] sm:$0xf]
      %v234 = vld [vmem:[%s1 + $0x10] sm:$0xf]
      %v235 = vld [vmem:[%s1 + $0x14] sm:$0xf]
      %v236 = vld [vmem:[%s1 + $0x18] sm:$0xf]
      %v237 = vld [vmem:[%s1 + $0x1c] sm:$0xf]
      %v238 = vld [vmem:[%s1 + $0x20] sm:$0xf]
      %v239 = vld [vmem:[%s1 + $0x24] sm:$0xf]
      %v240 = vld [vmem:[%s1 + $0x28] sm:$0xf]
      %v241 = vld [vmem:[%s1 + $0x2c] sm:$0xf]
      %v242 = vld [vmem:[%s1 + $0x30] sm:$0xf]
      %v243 = vld [vmem:[%s1 + $0x34] sm:$0xf]
      %v244 = vld [vmem:[%s1 + $0x38] sm:$0xf]
      %v245 = vld [vmem:[%s1 + $0x3c] sm:$0xf]
      %v246 = vld [vmem:[%s2] sm:$0x1]
      %v248 = vperm.slane %v246, 0
      %v252 = vunpack.c.l.b16 %v228
      %v253 = vunpack.c.l.b16 %v229
      %v254 = vpack.c.b16 %v253, %v252
      %v272 = vunpack.c.l.b16 %v230
      %v273 = vunpack.c.l.b16 %v231
      %v274 = vunpack.c.l.b16 %v232
      %v275 = vunpack.c.l.b16 %v233
      %v276 = vunpack.c.l.b16 %v234
      %v277 = vunpack.c.l.b16 %v235
      %v278 = vunpack.c.l.b16 %v236
      %v279 = vunpack.c.l.b16 %v237
      %v280 = vunpack.c.l.b16 %v238
      %v281 = vunpack.c.l.b16 %v239
      %v282 = vunpack.c.l.b16 %v240
      %v283 = vunpack.c.l.b16 %v241
      %v284 = vunpack.c.l.b16 %v242
      %v285 = vunpack.c.l.b16 %v243
      %v286 = vunpack.c.l.b16 %v244
      %v287 = vunpack.c.l.b16 %v245
      %v288 = vpack.c.b16 %v273, %v272
      %v289 = vpack.c.b16 %v275, %v274
      %v290 = vpack.c.b16 %v277, %v276
      %v291 = vpack.c.b16 %v279, %v278
      %v292 = vpack.c.b16 %v281, %v280
      %v293 = vpack.c.b16 %v283, %v282
      %v294 = vpack.c.b16 %v285, %v284
      %v295 = vpack.c.b16 %v287, %v286
      %304 = vmatpush.bf16.msra.mxu0 %v295
      %305 = vmatpush.bf16.msra.mxu0 %v294
      %306 = vmatpush.bf16.msra.mxu0 %v293
      %307 = vmatpush.bf16.msra.mxu0 %v292
      %308 = vmatpush.bf16.msra.mxu0 %v291
      %309 = vmatpush.bf16.msra.mxu0 %v290
      %310 = vmatpush.bf16.msra.mxu0 %v289
      %311 = vmatpush.bf16.msra.mxu0 %v288
      %312 = vmatmul.bf16.gmra.mxu0 %v254
      %v313 = vpop.f32.mrf.mxu0
      %v314 = vadd.f32 %v248, %v313
      %v315 = vpop.f32.mrf.mxu0
      %v316 = vadd.f32 %v248, %v315
      %317 = vdwg.mxu0
      %v318 = vmax.f32 %v314, 0.0
      %v319 = vmax.f32 %v316, 0.0
      %v320 = vpack.c.bf16 %v319, %v318
      %v321 = vld [vmem:[%s3] sm:$0xf]
      %v322 = vld [vmem:[%s3 + $0x4] sm:$0xf]
      %v323 = vld [vmem:[%s3 + $0x8] sm:$0xf]
      %v324 = vld [vmem:[%s3 + $0xc] sm:$0xf]
      %v325 = vld [vmem:[%s3 + $0x10] sm:$0xf]
      %v326 = vld [vmem:[%s3 + $0x14] sm:$0xf]
      %v327 = vld [vmem:[%s3 + $0x18] sm:$0xf]
      %v328 = vld [vmem:[%s3 + $0x1c] sm:$0xf]
      %v329 = vld [vmem:[%s3 + $0x20] sm:$0xf]
      %v330 = vld [vmem:[%s3 + $0x24] sm:$0xf]
      %v331 = vld [vmem:[%s3 + $0x28] sm:$0xf]
      %v332 = vld [vmem:[%s3 + $0x2c] sm:$0xf]
      %v333 = vld [vmem:[%s3 + $0x30] sm:$0xf]
      %v334 = vld [vmem:[%s3 + $0x34] sm:$0xf]
      %v335 = vld [vmem:[%s3 + $0x38] sm:$0xf]
      %v336 = vld [vmem:[%s3 + $0x3c] sm:$0xf]
      %v337 = vld [vmem:[%s4] sm:$0x1]
      %v339 = vperm.slane %v337, 0
      %v357 = vunpack.c.l.b16 %v321
      %v358 = vunpack.c.l.b16 %v322
      %v359 = vunpack.c.l.b16 %v323
      %v360 = vunpack.c.l.b16 %v324
      %v361 = vunpack.c.l.b16 %v325
      %v362 = vunpack.c.l.b16 %v326
      %v363 = vunpack.c.l.b16 %v327
      %v364 = vunpack.c.l.b16 %v328
      %v365 = vunpack.c.l.b16 %v329
      %v366 = vunpack.c.l.b16 %v330
      %v367 = vunpack.c.l.b16 %v331
      %v368 = vunpack.c.l.b16 %v332
      %v369 = vunpack.c.l.b16 %v333
      %v370 = vunpack.c.l.b16 %v334
      %v371 = vunpack.c.l.b16 %v335
      %v372 = vunpack.c.l.b16 %v336
      %v373 = vpack.c.b16 %v358, %v357
      %v374 = vpack.c.b16 %v360, %v359
      %v375 = vpack.c.b16 %v362, %v361
      %v376 = vpack.c.b16 %v364, %v363
      %v377 = vpack.c.b16 %v366, %v365
      %v378 = vpack.c.b16 %v368, %v367
      %v379 = vpack.c.b16 %v370, %v369
      %v380 = vpack.c.b16 %v372, %v371
      %389 = vmatpush.bf16.msra.mxu0 %v380
      %390 = vmatpush.bf16.msra.mxu0 %v379
      %391 = vmatpush.bf16.msra.mxu0 %v378
      %392 = vmatpush.bf16.msra.mxu0 %v377
      %393 = vmatpush.bf16.msra.mxu0 %v376
      %394 = vmatpush.bf16.msra.mxu0 %v375
      %395 = vmatpush.bf16.msra.mxu0 %v374
      %396 = vmatpush.bf16.msra.mxu0 %v373
      %397 = vmatmul.bf16.gmra.mxu0 %v320
      %v398 = vpop.f32.mrf.mxu0
      %v399 = vadd.f32 %v339, %v398
      %v400 = vpop.f32.mrf.mxu0
      %v401 = vadd.f32 %v339, %v400
      %402 = vdwg.mxu0
      %v403 = vunpack.c.l.bf16 %v228
      %v404 = vunpack.c.l.bf16 %v229
      %v405 = vadd.f32 %v403, %v399
      %v406 = vadd.f32 %v404, %v401
      %v407 = vpack.c.bf16 %v405, %v405
      %v408 = vpack.c.bf16 %v406, %v406
      %409 = vst [vmem:[%s226] sm:$0xf] %v407
      %410 = vst [vmem:[%s226 + $0x4] sm:$0xf] %v408
      %s411 = smul.u32 2, %s16
      %p412 = scmp.lt.s32.totalorder %s411, 3
      %s413 = scalar_select %p412, %s411, 3
      %s414 = smul.addr %s413, 4
      %s415 = scalar_lea.vmem %s5, %s414
      // Predicated region
      $region41: #{feature_mix_mixer_block.1} parent=39 // pred_check
        %p416 = pneg %p144
      $region42: #{feature_mix_mixer_block.1} parent=39 // pred_check_branch
        %418 = sbr.rel (%p416) target = $region44
      $region43: #{feature_mix_mixer_block.1} parent=39 // pred_region
        %s419 = smul.u32 2, %s16
      $region44: #{feature_mix_mixer_block.1} parent=39 // pred_fallthru
        _
    $region40: #{feature_mix_mixer_block.1} parent=5 // pred_fallthru
      _
    %p420 = scmp.le.s32.totalorder 2, %s11
    // Predicated region
    $region45: #{feature_mix_mixer_block.1} parent=5 // pred_check
      %p421 = pneg %p420
    $region46: #{feature_mix_mixer_block.1} parent=5 // pred_check_branch
      %423 = sbr.rel (%p421) target = $region48
    $region47: #{feature_mix_mixer_block.1} parent=5 // pred_region
      %s424 = ssub.s32 %s11, 2
      // Predicated region
      $region49: #{feature_mix_mixer_block.1} parent=47 // pred_check
        %p425 = pneg %p150
      $region50: #{feature_mix_mixer_block.1} parent=47 // pred_check_branch
        %427 = sbr.rel (%p425) target = $region52
      $region51: #{feature_mix_mixer_block.1} parent=47 // pred_region
        %s428 = smul.u32 2, %s17
        %p429 = scmp.lt.s32.totalorder %s428, 3
        %s430 = scalar_select %p429, %s428, 3
        %s431 = smul.addr %s430, 4
        %s432 = scalar_lea.vmem %s5, %s431
      $region52: #{feature_mix_mixer_block.1} parent=47 // pred_fallthru
        _
    $region48: #{feature_mix_mixer_block.1} parent=5 // pred_fallthru
      _
  $region6: #{feature_mix_mixer_block.1} parent=0 // loop_footer
    %s15 = sadd.s32 1, %s11
  $region7: #{feature_mix_mixer_block.1} parent=0 // loop_footer_branch
    %10 = sbr.rel target = $region3
  $region8: #{feature_mix_mixer_block.1} parent=0 // loop_exit
    _

</llo_original>
